<compile_context>
chip_gen: v7x
topology: tpu7x:2x2x1
jax: 0.10.0
libtpu: 0.0.40
codegen_flags: <defaults>
</compile_context>

<pallas_src>
import math

import jax
import jax.numpy as jnp
from jax.experimental import pallas as pl
from jax.experimental.pallas import tpu as pltpu

_DEFAULT_TILE_B = 32768   # 256 lane-columns per grid step: amortizes per-step overhead
_MAX_TILE_B = 32768       # VMEM cap: ~12 MiB peak at this tile -> fits v7x (64 MiB) and v5e/v6e


def _round_up(n, m):
    return ((n + m - 1) // m) * m


def _generator_kernel(x_ref, w1_ref, b1_ref, w2_ref, b2_ref, w3_ref, b3_ref, o_ref):
    # Feature-major tiles: [features, TILE_B]; batch lives on the 128-lane axis.
    x = x_ref[...].astype(jnp.float32)              # (3, TB): row 0 = label, rows 1-2 = noise
    w1 = w1_ref[...]                                # (16, 3) f32

    # Linear(3, 16): K=3 is too small for the MXU -> three VPU broadcast-FMAs instead.
    h1 = (w1[:, 0:1] * x[0:1, :]
          + w1[:, 1:2] * x[1:2, :]
          + w1[:, 2:3] * x[2:3, :]
          + b1_ref[...])
    h1 = jnp.maximum(h1, 0.0)                       # (16, TB) f32

    # Linear(16, 32) + ReLU: bf16 operands on the MXU, f32 accumulation.
    h2 = jnp.dot(w2_ref[...], h1.astype(jnp.bfloat16),
                 preferred_element_type=jnp.float32) + b2_ref[...]
    h2 = jnp.maximum(h2, 0.0)                       # (32, TB) f32

    # Linear(32, 2): bf16 operands, f32 accumulation; lane-dense (2, TB) store.
    out = jnp.dot(w3_ref[...], h2.astype(jnp.bfloat16),
                  preferred_element_type=jnp.float32) + b3_ref[...]
    o_ref[...] = out.astype(o_ref.dtype)


def _call_pallas(x_fm, kparams, tile_b, out_dtype):
    """x_fm: (3, B_pad) feature-major, B_pad a multiple of tile_b. Returns (2, B_pad)."""
    w1, b1, w2, b2, w3, b3 = kparams
    _, b_pad = x_fm.shape
    n_tiles = b_pad // tile_b
    # Weights/biases: full blocks, constant index map -> stay resident across grid steps.
    full = lambda a: pl.BlockSpec(a.shape, lambda i: (0, 0))
    return pl.pallas_call(
        _generator_kernel,
        out_shape=jax.ShapeDtypeStruct((2, b_pad), out_dtype),
        grid=(n_tiles,),
        in_specs=[
            pl.BlockSpec((3, tile_b), lambda i: (0, i)),       # [labels; noise] batch tile
            full(w1), full(b1), full(w2), full(b2), full(w3), full(b3),
        ],
        out_specs=pl.BlockSpec((2, tile_b), lambda i: (0, i)),
        compiler_params=pltpu.CompilerParams(
            dimension_semantics=("parallel",),   # independent batch tiles (v7x: both TCs)
        ),
    )(x_fm, w1, b1, w2, b2, w3, b3)


def _pick_tile_rowmajor(B, tile_b):
    """Tile for the row-major wrapper: big (amortize step overhead), capped for VMEM, and
    guaranteeing >= 2 grid tiles whenever B > 128 so v7x's two TensorCores both get work."""
    tile_b = max(128, min(tile_b, _MAX_TILE_B))
    if B > 128:
        per_core = _round_up(pl.cdiv(B, 2), 128)
        tile_b = min(tile_b, per_core)
    else:
        tile_b = 128
    return tile_b


def _pick_tile_feature_major(b_pad, tile_b):
    """Largest 128-multiple tile that divides B_pad, <= the VMEM cap, and gives >= 2 grid
    tiles when possible (v7x megacore)."""
    blocks = b_pad // 128
    max_blk = max(1, min(tile_b, _MAX_TILE_B) // 128)
    if blocks >= 2:
        max_blk = min(max_blk, max(1, blocks // 2))
    blk = min(max_blk, blocks)
    while blocks % blk:          # bounded trace-time search for a divisor
        blk -= 1
    return blk * 128


def generator_forward_fm(x_fm, kparams, *, tile_b=_DEFAULT_TILE_B, out_dtype=jnp.float32):
    """Relayout-free fast path: x_fm is (3, B_pad) feature-major (row 0 = labels, rows 1-2 =
    noise), B_pad a multiple of 128. Returns (2, B_pad). Use this from a training loop so no
    wrapper-side transposes/pads/slices touch HBM."""
    f, b_pad = x_fm.shape
    if f != 3 or b_pad % 128 != 0:
        raise ValueError("x_fm must be (3, B_pad) with B_pad a multiple of 128")
    tile = _pick_tile_feature_major(b_pad, tile_b)
    return _call_pallas(x_fm, kparams, tile, out_dtype)


def generator_forward(noise, labels, kparams, *, tile_b=_DEFAULT_TILE_B, io_dtype=jnp.float32):
    """Row-major API matching the PyTorch module: noise (B, 2), labels (B, 1) -> (B, 2) f32."""
    if labels.ndim == 1:
        labels = labels[:, None]
    B = noise.shape[0]
    tile = _pick_tile_rowmajor(B, tile_b)
    n_tiles = pl.cdiv(B, tile)
    b_pad = n_tiles * tile

    # Single boundary relayout pass: concat + transpose + zero-pad to a tile multiple.
    x = jnp.concatenate([labels, noise], axis=-1)                    # (B, 3)
    x_fm = jnp.pad(x.T, ((0, 0), (0, b_pad - B))).astype(io_dtype)   # (3, B_pad)

    out_fm = _call_pallas(x_fm, kparams, tile, io_dtype)             # (2, B_pad)
    return out_fm[:, :B].T.astype(jnp.float32)                       # back to (B, 2)


def init_generator_params(key):
    """torch.nn.Linear-style init (uniform +-1/sqrt(fan_in)), torch (out, in) layout, f32."""
    dims = [(3, 16), (16, 32), (32, 2)]
    raw = []
    for fan_in, fan_out in dims:
        key, kw, kb = jax.random.split(key, 3)
        bound = 1.0 / math.sqrt(fan_in)
        w = jax.random.uniform(kw, (fan_out, fan_in), jnp.float32, -bound, bound)
        b = jax.random.uniform(kb, (fan_out,), jnp.float32, -bound, bound)
        raw += [w, b]
    return tuple(raw)   # (w1, b1, w2, b2, w3, b3)


def prepare_params(params):
    """Kernel layout: biases as (out, 1) columns (broadcast along the lane/batch axis);
    w2/w3 pre-cast to bf16 so the MXU runs its native bf16 path (f32 accumulation)."""
    w1, b1, w2, b2, w3, b3 = params
    col = lambda b: b.reshape(-1, 1).astype(jnp.float32)
    return (w1.astype(jnp.float32), col(b1),
            w2.astype(jnp.bfloat16), col(b2),
            w3.astype(jnp.bfloat16), col(b3))


def _reference_forward(noise, labels, params):
    w1, b1, w2, b2, w3, b3 = params
    x = jnp.concatenate([labels, noise], axis=-1)            # (B, 3)
    h1 = jnp.maximum(x @ w1.T + b1, 0.0)
    h2 = jnp.maximum(h1 @ w2.T + b2, 0.0)
    return h2 @ w3.T + b3


if __name__ == "__main__":
    key = jax.random.PRNGKey(0)
    kp, kn, kl, kn2, kl2 = jax.random.split(key, 5)

    params = init_generator_params(kp)
    kparams = prepare_params(params)

    # Small case consistent with the module (batch = 8) -> single 128-column tile.
    B = 8
    noise = jax.random.normal(kn, (B, 2), jnp.float32)
    labels = jax.random.uniform(kl, (B, 1), jnp.float32)
    out = jax.block_until_ready(generator_forward(noise, labels, kparams))
    ref = _reference_forward(noise, labels, params)
    assert out.shape == (B, 2)
    assert jnp.allclose(out, ref, atol=5e-2, rtol=5e-2)

    # Ragged batch -> 2 grid tiles (exercises the >=2-tile v7x clamp + zero-pad path).
    B2 = 300
    noise2 = jax.random.normal(kn2, (B2, 2), jnp.float32)
    labels2 = jax.random.uniform(kl2, (B2, 1), jnp.float32)
    out2 = jax.block_until_ready(generator_forward(noise2, labels2, kparams))
    ref2 = _reference_forward(noise2, labels2, params)
    assert out2.shape == (B2, 2)
    assert jnp.allclose(out2, ref2, atol=5e-2, rtol=5e-2)

    # Feature-major, relayout-free contract (the fast path for a GAN training loop).
    B_pad = 384
    x_fm = jnp.pad(jnp.concatenate([labels2, noise2], axis=-1).T, ((0, 0), (0, B_pad - B2)))
    out_fm = jax.block_until_ready(generator_forward_fm(x_fm, kparams))
    assert out_fm.shape == (2, B_pad)
    assert jnp.allclose(out_fm[:, :B2].T, ref2, atol=5e-2, rtol=5e-2)

    # bf16 HBM I/O (bandwidth lever on v6e/v7x); in-kernel compute/accumulation unchanged.
    out_bf16 = jax.block_until_ready(
        generator_forward(noise2, labels2, kparams, io_dtype=jnp.bfloat16))
    assert jnp.allclose(out_bf16, ref2, atol=1.5e-1, rtol=1.5e-1)

    print("KERNEL_OK")
</pallas_src>

<mosaic_0001>
module attributes {stable_mosaic.version = 11 : i64} {
  func.func @_generator_kernel(%arg0: i32, %arg1: memref<3x128xf32, #tpu.memory_space<vmem>>, %arg2: memref<16x3xf32, #tpu.memory_space<vmem>>, %arg3: memref<16x1xf32, #tpu.memory_space<vmem>>, %arg4: memref<32x16xbf16, #tpu.memory_space<vmem>>, %arg5: memref<32x1xf32, #tpu.memory_space<vmem>>, %arg6: memref<2x32xbf16, #tpu.memory_space<vmem>>, %arg7: memref<2x1xf32, #tpu.memory_space<vmem>>, %arg8: memref<2x128xf32, #tpu.memory_space<vmem>>) attributes {dimension_semantics = [#tpu.dimension_semantics<parallel>], iteration_bounds = array<i64: 1>, scalar_prefetch = 0 : i64, scratch_operands = 0 : i64, tpu.core_type = #tpu.core_type<tc>, window_params = [{transform_indices = @transform_0, window_bounds = array<i64: 3, 128>}, {pipeline_mode = #tpu.pipeline_mode<synchronous>, transform_indices = @transform_1, window_bounds = array<i64: 16, 3>}, {pipeline_mode = #tpu.pipeline_mode<synchronous>, transform_indices = @transform_2, window_bounds = array<i64: 16, 1>}, {pipeline_mode = #tpu.pipeline_mode<synchronous>, transform_indices = @transform_3, window_bounds = array<i64: 32, 16>}, {pipeline_mode = #tpu.pipeline_mode<synchronous>, transform_indices = @transform_4, window_bounds = array<i64: 32, 1>}, {pipeline_mode = #tpu.pipeline_mode<synchronous>, transform_indices = @transform_5, window_bounds = array<i64: 2, 32>}, {pipeline_mode = #tpu.pipeline_mode<synchronous>, transform_indices = @transform_6, window_bounds = array<i64: 2, 1>}, {transform_indices = @transform_7, window_bounds = array<i64: 2, 128>}]} {
    %c0 = arith.constant 0 : index
    %c0_0 = arith.constant 0 : index
    %0 = vector.load %arg1[%c0, %c0_0] : memref<3x128xf32, #tpu.memory_space<vmem>>, vector<3x128xf32>
    %c0_1 = arith.constant 0 : index
    %c0_2 = arith.constant 0 : index
    %1 = vector.load %arg2[%c0_1, %c0_2] : memref<16x3xf32, #tpu.memory_space<vmem>>, vector<16x3xf32>
    %2 = vector.extract_strided_slice %1 {offsets = [0, 0], sizes = [16, 1], strides = [1, 1]} : vector<16x3xf32> to vector<16x1xf32>
    %3 = vector.extract_strided_slice %0 {offsets = [0, 0], sizes = [1, 128], strides = [1, 1]} : vector<3x128xf32> to vector<1x128xf32>
    %4 = vector.broadcast %2 : vector<16x1xf32> to vector<16x128xf32>
    %5 = vector.broadcast %3 : vector<1x128xf32> to vector<16x128xf32>
    %6 = arith.mulf %4, %5 : vector<16x128xf32>
    %7 = vector.extract_strided_slice %1 {offsets = [0, 1], sizes = [16, 1], strides = [1, 1]} : vector<16x3xf32> to vector<16x1xf32>
    %8 = vector.extract_strided_slice %0 {offsets = [1, 0], sizes = [1, 128], strides = [1, 1]} : vector<3x128xf32> to vector<1x128xf32>
    %9 = vector.broadcast %7 : vector<16x1xf32> to vector<16x128xf32>
    %10 = vector.broadcast %8 : vector<1x128xf32> to vector<16x128xf32>
    %11 = arith.mulf %9, %10 : vector<16x128xf32>
    %12 = arith.addf %6, %11 : vector<16x128xf32>
    %13 = vector.extract_strided_slice %1 {offsets = [0, 2], sizes = [16, 1], strides = [1, 1]} : vector<16x3xf32> to vector<16x1xf32>
    %14 = vector.extract_strided_slice %0 {offsets = [2, 0], sizes = [1, 128], strides = [1, 1]} : vector<3x128xf32> to vector<1x128xf32>
    %15 = vector.broadcast %13 : vector<16x1xf32> to vector<16x128xf32>
    %16 = vector.broadcast %14 : vector<1x128xf32> to vector<16x128xf32>
    %17 = arith.mulf %15, %16 : vector<16x128xf32>
    %18 = arith.addf %12, %17 : vector<16x128xf32>
    %c0_3 = arith.constant 0 : index
    %c0_4 = arith.constant 0 : index
    %19 = vector.load %arg3[%c0_3, %c0_4] : memref<16x1xf32, #tpu.memory_space<vmem>>, vector<16x1xf32>
    %20 = vector.broadcast %19 : vector<16x1xf32> to vector<16x128xf32>
    %21 = arith.addf %18, %20 : vector<16x128xf32>
    %cst = arith.constant 0.000000e+00 : f32
    %22 = vector.broadcast %cst : f32 to vector<16x128xf32>
    %23 = arith.maximumf %21, %22 : vector<16x128xf32>
    %c0_5 = arith.constant 0 : index
    %c0_6 = arith.constant 0 : index
    %24 = vector.load %arg4[%c0_5, %c0_6] : memref<32x16xbf16, #tpu.memory_space<vmem>>, vector<32x16xbf16>
    %25 = arith.truncf %23 : vector<16x128xf32> to vector<16x128xbf16>
    %cst_7 = arith.constant dense<0.000000e+00> : vector<32x128xf32>
    %26 = tpu.matmul %24, %25, %cst_7 {dimension_numbers = #tpu.dot_dimension_numbers<[1], [0], [0], [1], [0, 0, 1, 1], [], []>} : vector<32x16xbf16>, vector<16x128xbf16>, vector<32x128xf32> -> vector<32x128xf32>
    %c0_8 = arith.constant 0 : index
    %c0_9 = arith.constant 0 : index
    %27 = vector.load %arg5[%c0_8, %c0_9] : memref<32x1xf32, #tpu.memory_space<vmem>>, vector<32x1xf32>
    %28 = vector.broadcast %27 : vector<32x1xf32> to vector<32x128xf32>
    %29 = arith.addf %26, %28 : vector<32x128xf32>
    %cst_10 = arith.constant 0.000000e+00 : f32
    %30 = vector.broadcast %cst_10 : f32 to vector<32x128xf32>
    %31 = arith.maximumf %29, %30 : vector<32x128xf32>
    %c0_11 = arith.constant 0 : index
    %c0_12 = arith.constant 0 : index
    %32 = vector.load %arg6[%c0_11, %c0_12] : memref<2x32xbf16, #tpu.memory_space<vmem>>, vector<2x32xbf16>
    %33 = arith.truncf %31 : vector<32x128xf32> to vector<32x128xbf16>
    %cst_13 = arith.constant dense<0.000000e+00> : vector<2x128xf32>
    %34 = tpu.matmul %32, %33, %cst_13 {dimension_numbers = #tpu.dot_dimension_numbers<[1], [0], [0], [1], [0, 0, 1, 1], [], []>} : vector<2x32xbf16>, vector<32x128xbf16>, vector<2x128xf32> -> vector<2x128xf32>
    %c0_14 = arith.constant 0 : index
    %c0_15 = arith.constant 0 : index
    %35 = vector.load %arg7[%c0_14, %c0_15] : memref<2x1xf32, #tpu.memory_space<vmem>>, vector<2x1xf32>
    %36 = vector.broadcast %35 : vector<2x1xf32> to vector<2x128xf32>
    %37 = arith.addf %34, %36 : vector<2x128xf32>
    %c0_16 = arith.constant 0 : index
    %c0_17 = arith.constant 0 : index
    %38 = vector.load %arg8[%c0_16, %c0_17] : memref<2x128xf32, #tpu.memory_space<vmem>>, vector<2x128xf32>
    tpu.vector_store %arg8[%c0_16, %c0_17], %37 {strides = array<i32>} : memref<2x128xf32, #tpu.memory_space<vmem>>, vector<2x128xf32>,
    return
  }
  func.func @transform_0(%arg0: i32) -> (i32, i32) {
    %c0_i32 = arith.constant 0 : i32
    %c0_i32_0 = arith.constant 0 : i32
    return %c0_i32, %arg0 : i32, i32
  }
  func.func @transform_1(%arg0: i32) -> (i32, i32) {
    %c0_i32 = arith.constant 0 : i32
    %c0_i32_0 = arith.constant 0 : i32
    %c0_i32_1 = arith.constant 0 : i32
    return %c0_i32, %c0_i32_0 : i32, i32
  }
  func.func @transform_2(%arg0: i32) -> (i32, i32) {
    %c0_i32 = arith.constant 0 : i32
    %c0_i32_0 = arith.constant 0 : i32
    %c0_i32_1 = arith.constant 0 : i32
    return %c0_i32, %c0_i32_0 : i32, i32
  }
  func.func @transform_3(%arg0: i32) -> (i32, i32) {
    %c0_i32 = arith.constant 0 : i32
    %c0_i32_0 = arith.constant 0 : i32
    %c0_i32_1 = arith.constant 0 : i32
    return %c0_i32, %c0_i32_0 : i32, i32
  }
  func.func @transform_4(%arg0: i32) -> (i32, i32) {
    %c0_i32 = arith.constant 0 : i32
    %c0_i32_0 = arith.constant 0 : i32
    %c0_i32_1 = arith.constant 0 : i32
    return %c0_i32, %c0_i32_0 : i32, i32
  }
  func.func @transform_5(%arg0: i32) -> (i32, i32) {
    %c0_i32 = arith.constant 0 : i32
    %c0_i32_0 = arith.constant 0 : i32
    %c0_i32_1 = arith.constant 0 : i32
    return %c0_i32, %c0_i32_0 : i32, i32
  }
  func.func @transform_6(%arg0: i32) -> (i32, i32) {
    %c0_i32 = arith.constant 0 : i32
    %c0_i32_0 = arith.constant 0 : i32
    %c0_i32_1 = arith.constant 0 : i32
    return %c0_i32, %c0_i32_0 : i32, i32
  }
  func.func @transform_7(%arg0: i32) -> (i32, i32) {
    %c0_i32 = arith.constant 0 : i32
    %c0_i32_0 = arith.constant 0 : i32
    return %c0_i32, %arg0 : i32, i32
  }
}

</mosaic_0001>

<llo_original>
// kernel: tpu_custom_call.1
$region0: #{tpu_custom_call.1}
  #allocation0 [shape = 'u32[]', space=smem, size = 0x4, offset = 0x4, fixed_abs, tag = 'smem constant byte address 0x4 - core index']
  #allocation1 [shape = 'u32[144,128]{1,0:T(1,128)}', space=vmem, size = 0x12000, scoped, tag = 'internal scratch']
  %s0 = inlined_call_operand.vmem [shape: f32[3,128], index: 0, kind: input, shape index: {}]
  %s1 = inlined_call_operand.vmem [shape: f32[16,3], index: 1, kind: input, shape index: {}]
  %s2 = inlined_call_operand.vmem [shape: f32[16,1], index: 2, kind: input, shape index: {}]
  %s3 = inlined_call_operand.vmem [shape: bf16[32,16], index: 3, kind: input, shape index: {}]
  %s4 = inlined_call_operand.vmem [shape: f32[32,1], index: 4, kind: input, shape index: {}]
  %s5 = inlined_call_operand.vmem [shape: bf16[2,32], index: 5, kind: input, shape index: {}]
  %s6 = inlined_call_operand.vmem [shape: f32[2,1], index: 6, kind: input, shape index: {}]
  %s7 = inlined_call_operand.hbm [shape: f32[2,128], index: 7, kind: output, shape index: {}]
  %s8 = sld [smem:[#allocation0]]
  $region38: #{tpu_custom_call.1} parent=0
    _
  %s10 = ssub.s32 1, %s8
  %s11 = scalar_select 0, %s10, %s8
  $region1: #{tpu_custom_call.1} parent=0
    #allocation2 [shape = 'u8[1024]{0}', space=vmem, size = 0x400, scoped, tag = 'output window, operand 0, single buffered']
    #allocation3 [shape = 's32[1]{0}', space=sflag, size = 0x4, scoped, tag = 'scoped memory for tpu_custom_call.1']
    %12 = vsyncpa [#allocation3], 0
    // Predicated region
    $region2: #{tpu_custom_call.1} parent=1 // pred_check
      _
    $region3: #{tpu_custom_call.1} parent=1 // pred_check_branch
      %14 = sbr.rel (0) target = $region5
    $region4: #{tpu_custom_call.1} parent=1 // pred_region
      _
    $region5: #{tpu_custom_call.1} parent=1 // pred_fallthru
      _
    // Predicated region
    $region6: #{tpu_custom_call.1} parent=1 // pred_check
      _
    $region7: #{tpu_custom_call.1} parent=1 // pred_check_branch
      %16 = sbr.rel (0) target = $region9
    $region8: #{tpu_custom_call.1} parent=1 // pred_region
      _
    $region9: #{tpu_custom_call.1} parent=1 // pred_fallthru
      _
    // Predicated region
    $region10: #{tpu_custom_call.1} parent=1 // pred_check
      _
    $region11: #{tpu_custom_call.1} parent=1 // pred_check_branch
      %18 = sbr.rel (0) target = $region13
    $region12: #{tpu_custom_call.1} parent=1 // pred_region
      _
    $region13: #{tpu_custom_call.1} parent=1 // pred_fallthru
      _
    // Predicated region
    $region14: #{tpu_custom_call.1} parent=1 // pred_check
      _
    $region15: #{tpu_custom_call.1} parent=1 // pred_check_branch
      %20 = sbr.rel (0) target = $region17
    $region16: #{tpu_custom_call.1} parent=1 // pred_region
      _
    $region17: #{tpu_custom_call.1} parent=1 // pred_fallthru
      _
    // Predicated region
    $region18: #{tpu_custom_call.1} parent=1 // pred_check
      _
    $region19: #{tpu_custom_call.1} parent=1 // pred_check_branch
      %22 = sbr.rel (0) target = $region21
    $region20: #{tpu_custom_call.1} parent=1 // pred_region
      _
    $region21: #{tpu_custom_call.1} parent=1 // pred_fallthru
      _
    // Predicated region
    $region22: #{tpu_custom_call.1} parent=1 // pred_check
      _
    $region23: #{tpu_custom_call.1} parent=1 // pred_check_branch
      %24 = sbr.rel (0) target = $region25
    $region24: #{tpu_custom_call.1} parent=1 // pred_region
      _
    $region25: #{tpu_custom_call.1} parent=1 // pred_fallthru
      _
    // Predicated region
    $region26: #{tpu_custom_call.1} parent=1 // pred_check
      _
    $region27: #{tpu_custom_call.1} parent=1 // pred_check_branch
      %26 = sbr.rel (0) target = $region29
    $region28: #{tpu_custom_call.1} parent=1 // pred_region
      _
    $region29: #{tpu_custom_call.1} parent=1 // pred_fallthru
      _
    %v28 = vld [vmem:[%s0] sm:$0x7]
    %v29 = vld [vmem:[%s1] sm:$0xff]
    %v30 = vld [vmem:[%s1 + $0x8] sm:$0xff]
    %32 = vset.pattern.permute.xlu0 0
    %33 = vperm.xlu0 %32, %v29
    %v34 = vpop.permute.xlu0 %33
    %37 = vset.pattern.permute.xlu0 0
    %38 = vperm.xlu0 %37, %v30
    %v39 = vpop.permute.xlu0 %38
    %v41 = vlaneseq
    %v42 = vshrl.u32 %v41, 7
    %v43 = vsub.s32 0, %v42
    %v44 = vrot.slane %v28, %v43
    %v45 = vmul.f32 %v34, %v44
    %v46 = vmul.f32 %v39, %v44
    %47 = vset.pattern.permute.xlu0 1
    %48 = vperm.xlu0 %47, %v29
    %v49 = vpop.permute.xlu0 %48
    %51 = vset.pattern.permute.xlu0 1
    %52 = vperm.xlu0 %51, %v30
    %v53 = vpop.permute.xlu0 %52
    %v55 = vlaneseq
    %v56 = vshrl.u32 %v55, 7
    %v57 = vsub.s32 1, %v56
    %v58 = vrot.slane %v28, %v57
    %v59 = vmul.f32 %v49, %v58
    %v60 = vmul.f32 %v53, %v58
    %v61 = vadd.f32 %v45, %v59
    %v62 = vadd.f32 %v46, %v60
    %63 = vset.pattern.permute.xlu0 2
    %64 = vperm.xlu0 %63, %v29
    %v65 = vpop.permute.xlu0 %64
    %67 = vset.pattern.permute.xlu0 2
    %68 = vperm.xlu0 %67, %v30
    %v69 = vpop.permute.xlu0 %68
    %v71 = vlaneseq
    %v72 = vshrl.u32 %v71, 7
    %v73 = vsub.s32 2, %v72
    %v74 = vrot.slane %v28, %v73
    %v75 = vmul.f32 %v65, %v74
    %v76 = vmul.f32 %v69, %v74
    %v77 = vadd.f32 %v61, %v75
    %v78 = vadd.f32 %v62, %v76
    %v79 = vld [vmem:[%s2] sm:$0xff]
    %v80 = vld [vmem:[%s2 + $0x8] sm:$0xff]
    %82 = vset.pattern.permute.xlu0 0
    %83 = vperm.xlu0 %82, %v79
    %v84 = vpop.permute.xlu0 %83
    %87 = vset.pattern.permute.xlu0 0
    %88 = vperm.xlu0 %87, %v80
    %v89 = vpop.permute.xlu0 %88
    %v91 = vadd.f32 %v77, %v84
    %v92 = vadd.f32 %v78, %v89
    %v93 = vmax.f32 %v91, 0.0
    %v94 = vmax.f32 %v92, 0.0
    %v95 = vld [vmem:[%s3] sm:$0xf]
    %v96 = vld [vmem:[%s3 + $0x4] sm:$0xf]
    %v97 = vld [vmem:[%s3 + $0x8] sm:$0xf]
    %v98 = vld [vmem:[%s3 + $0xc] sm:$0xf]
    %v99 = vpack.c.bf16 %v94, %v93
    %v100 = vld [vmem:[%s4] sm:$0xff]
    %v101 = vld [vmem:[%s4 + $0x8] sm:$0xff]
    %v102 = vld [vmem:[%s4 + $0x10] sm:$0xff]
    %v103 = vld [vmem:[%s4 + $0x18] sm:$0xff]
    %105 = vset.pattern.permute.xlu0 0
    %106 = vperm.xlu0 %105, %v100
    %v107 = vpop.permute.xlu0 %106
    %110 = vset.pattern.permute.xlu0 0
    %111 = vperm.xlu0 %110, %v101
    %v112 = vpop.permute.xlu0 %111
    %115 = vset.pattern.permute.xlu0 0
    %116 = vperm.xlu0 %115, %v102
    %v117 = vpop.permute.xlu0 %116
    %120 = vset.pattern.permute.xlu0 0
    %121 = vperm.xlu0 %120, %v103
    %v122 = vpop.permute.xlu0 %121
    %v128 = vunpack.c.l.b16 %v95
    %v129 = vunpack.c.l.b16 %v96
    %v130 = vunpack.c.l.b16 %v97
    %v131 = vunpack.c.l.b16 %v98
    %v132 = vpack.c.b16 %v129, %v128
    %v133 = vpack.c.b16 %v131, %v130
    %vm134 = vcmask 130048
    %v136 = vsel %vm134, %v132, 0
    %v139 = vsel %vm134, %v133, 0
    %141 = vmatprep.subr.bf16.mxu0 0
    %142 = vmatpush1.bf16.msra.mxu0 %v99
    %143 = vmatprep.subr.bf16.mxu0 0
    %144 = vmatpush1.bf16.msra.mxu0 0
    %145 = vmatprep.subr.bf16.mxu0 0
    %146 = vmatpush1.bf16.msra.mxu0 0
    %147 = vmatprep.subr.bf16.mxu0 0
    %148 = vmatpush1.bf16.msra.mxu0 0
    %149 = vmatprep.subr.bf16.mxu0 0
    %150 = vmatpush1.bf16.msra.mxu0 0
    %151 = vmatprep.subr.bf16.mxu0 0
    %152 = vmatpush1.bf16.msra.mxu0 0
    %153 = vmatprep.subr.bf16.mxu0 0
    %154 = vmatpush1.bf16.msra.mxu0 0
    %155 = vmatprep.subr.bf16.mxu0 0
    %156 = vmatpush1.bf16.msra.mxu0 0
    %157 = vmatprep.subr.bf16.mxu0 0
    %158 = vmatpush1.bf16.msra.mxu0 0
    %159 = vmatprep.subr.bf16.mxu0 0
    %160 = vmatpush1.bf16.msra.mxu0 0
    %161 = vmatprep.subr.bf16.mxu0 0
    %162 = vmatpush1.bf16.msra.mxu0 0
    %163 = vmatprep.subr.bf16.mxu0 0
    %164 = vmatpush1.bf16.msra.mxu0 0
    %165 = vmatprep.subr.bf16.mxu0 0
    %166 = vmatpush1.bf16.msra.mxu0 0
    %167 = vmatprep.subr.bf16.mxu0 0
    %168 = vmatpush1.bf16.msra.mxu0 0
    %169 = vmatprep.subr.bf16.mxu0 0
    %170 = vmatpush1.bf16.msra.mxu0 0
    %171 = vmatprep.subr.bf16.mxu0 0
    %172 = vmatpush1.bf16.msra.mxu0 0
    %173 = vmatprep.mubr.bf16.mxu0 0
    %174 = vmatmul.mubr.bf16.gmra.mrb[0].mxu0 %v136
    %v175 = vpop.f32.mrb[0].mxu0
    %v176 = vadd.f32 %v107, %v175
    %v177 = vpop.f32.mrb[0].mxu0
    %v178 = vpop.f32.mrb[0].mxu0
    %v179 = vadd.f32 %v112, %v178
    %v180 = vpop.f32.mrb[0].mxu0
    %181 = vmatprep.mubr.bf16.mxu0 0
    %182 = vmatmul.mubr.bf16.gmra.mrb[0].mxu0 %v139
    %v183 = vpop.f32.mrb[0].mxu0
    %v184 = vadd.f32 %v117, %v183
    %v185 = vpop.f32.mrb[0].mxu0
    %v186 = vpop.f32.mrb[0].mxu0
    %v187 = vadd.f32 %v122, %v186
    %v188 = vpop.f32.mrb[0].mxu0
    %189 = vdwg.mxu0
    %v190 = vmax.f32 %v176, 0.0
    %v191 = vmax.f32 %v179, 0.0
    %v192 = vmax.f32 %v184, 0.0
    %v193 = vmax.f32 %v187, 0.0
    %v194 = vld [vmem:[%s5] sm:$0x1]
    %v195 = vpack.c.bf16 %v191, %v190
    %v196 = vpack.c.bf16 %v193, %v192
    %v197 = vld [vmem:[%s6] sm:$0x3]
    %199 = vset.pattern.permute.xlu0 0
    %200 = vperm.xlu0 %199, %v197
    %v201 = vpop.permute.xlu0 %200
    %vm203 = vcmask 261120
    %v205 = vsel %vm203, %v194, 0
    %207 = vmatprep.subr.bf16.mxu0 0
    %208 = vmatpush1.bf16.msra.mxu0 %v195
    %209 = vmatprep.subr.bf16.mxu0 0
    %210 = vmatpush1.bf16.msra.mxu0 %v196
    %211 = vmatprep.subr.bf16.mxu0 0
    %212 = vmatpush1.bf16.msra.mxu0 0
    %213 = vmatprep.subr.bf16.mxu0 0
    %214 = vmatpush1.bf16.msra.mxu0 0
    %215 = vmatprep.subr.bf16.mxu0 0
    %216 = vmatpush1.bf16.msra.mxu0 0
    %217 = vmatprep.subr.bf16.mxu0 0
    %218 = vmatpush1.bf16.msra.mxu0 0
    %219 = vmatprep.subr.bf16.mxu0 0
    %220 = vmatpush1.bf16.msra.mxu0 0
    %221 = vmatprep.subr.bf16.mxu0 0
    %222 = vmatpush1.bf16.msra.mxu0 0
    %223 = vmatprep.subr.bf16.mxu0 0
    %224 = vmatpush1.bf16.msra.mxu0 0
    %225 = vmatprep.subr.bf16.mxu0 0
    %226 = vmatpush1.bf16.msra.mxu0 0
    %227 = vmatprep.subr.bf16.mxu0 0
    %228 = vmatpush1.bf16.msra.mxu0 0
    %229 = vmatprep.subr.bf16.mxu0 0
    %230 = vmatpush1.bf16.msra.mxu0 0
    %231 = vmatprep.subr.bf16.mxu0 0
    %232 = vmatpush1.bf16.msra.mxu0 0
    %233 = vmatprep.subr.bf16.mxu0 0
    %234 = vmatpush1.bf16.msra.mxu0 0
    %235 = vmatprep.subr.bf16.mxu0 0
    %236 = vmatpush1.bf16.msra.mxu0 0
    %237 = vmatprep.subr.bf16.mxu0 0
    %238 = vmatpush1.bf16.msra.mxu0 0
    %239 = vmatprep.mubr.bf16.mxu0 0
    %240 = vmatmul.mubr.bf16.gmra.mrb[0].mxu0 %v205
    %v241 = vpop.f32.mrb[0].mxu0
    %v242 = vadd.f32 %v201, %v241
    %v243 = vpop.f32.mrb[0].mxu0
    %v244 = vpop.f32.mrb[0].mxu0
    %v245 = vpop.f32.mrb[0].mxu0
    %246 = vdwg.mxu0
    %247 = vst [vmem:[#allocation2] sm:$0x3] %v242
    // Predicated region
    $region30: #{tpu_custom_call.1} parent=1 // pred_check
      _
    $region31: #{tpu_custom_call.1} parent=1 // pred_check_branch
      %249 = sbr.rel (0) target = $region33
    $region32: #{tpu_custom_call.1} parent=1 // pred_region
      %s251 = ssub.s32 32, 32
      %252 = vsyncadd [#allocation3], %s251
      %s254 = sshll.u32 [#allocation2], 4
      %s255 = int_to_ptr.vmem [resolvable:$true] %s254
      %257 = dma.vmem_to_hbm [thread:$0]  %s255, 32, %s7, [#allocation3]
    $region33: #{tpu_custom_call.1} parent=1 // pred_fallthru
      _
    // Predicated region
    $region34: #{tpu_custom_call.1} parent=1 // pred_check
      _
    $region35: #{tpu_custom_call.1} parent=1 // pred_check_branch
      %259 = sbr.rel (0) target = $region37
    $region36: #{tpu_custom_call.1} parent=1 // pred_region
      %260 = dma.done [#allocation3], 32
    $region37: #{tpu_custom_call.1} parent=1 // pred_fallthru
      _
    %261 = vsyncpa [#allocation3], 1

</llo_original>
